<compile_context>
chip_gen: v5e
topology: v5e:2x2
jax: 0.10.0
libtpu: 0.0.40
codegen_flags: <defaults>
</compile_context>

<pallas_src>
import functools

import jax
import jax.numpy as jnp
from jax.experimental import pallas as pl
from jax.experimental.pallas import tpu as pltpu


def _round_up(x: int, m: int) -> int:
    return (x + m - 1) // m * m


def _sublane_multiple(dtype) -> int:
    # Minimum sublane extent for a native tile at this dtype.
    return {4: 8, 2: 16, 1: 32}.get(jnp.dtype(dtype).itemsize, 8)


def _largest_tile(padded_dim: int, cap: int) -> int:
    """Largest multiple-of-128 divisor of `padded_dim` that is <= cap (>=128)."""
    assert padded_dim % 128 == 0
    q = padded_dim // 128
    best = 1
    d = 1
    while d * d <= q:
        if q % d == 0:
            for c in (d, q // d):
                if c * 128 <= cap and c > best:
                    best = c
        d += 1
    return best * 128


# ---------------------------------------------------------------------------
# Kernels
# ---------------------------------------------------------------------------
def _linear_kernel_f32_out(x_ref, w_ref, b_ref, o_ref):
    """Output is f32: accumulate straight into o_ref; bias is the k==0 init."""
    k = pl.program_id(2)

    @pl.when(k == 0)
    def _():
        o_ref[...] = jnp.broadcast_to(b_ref[...], o_ref.shape)

    o_ref[...] += jnp.dot(
        x_ref[...], w_ref[...], preferred_element_type=jnp.float32
    )


def _linear_kernel_acc(x_ref, w_ref, b_ref, o_ref, acc_ref):
    """Low-precision output: f32 VMEM accumulator, bias-add + cast epilogue."""
    k = pl.program_id(2)

    @pl.when(k == 0)
    def _():
        acc_ref[...] = jnp.zeros_like(acc_ref)

    acc_ref[...] += jnp.dot(
        x_ref[...], w_ref[...], preferred_element_type=jnp.float32
    )

    @pl.when(k == pl.num_programs(2) - 1)
    def _():
        o_ref[...] = (acc_ref[...] + b_ref[...]).astype(o_ref.dtype)


# ---------------------------------------------------------------------------
# One-time parameter preparation (NOT in the per-call hot path).
# ---------------------------------------------------------------------------
def prepare_params(weight, bias, *, param_dtype=None):
    """Transpose + lane-pad the static nn.Linear parameters once.

    weight: (num_classes, in_features)  (PyTorch layout)
    bias:   (num_classes,)
    Returns (w_t, bias_row):
      w_t:      (K_pad, N_pad) = weight.T zero-padded; optionally cast to
                `param_dtype` (e.g. jnp.bfloat16) to halve weight HBM traffic.
      bias_row: (1, N_pad) float32.
    """
    num_classes, in_features = weight.shape
    k_pad = _round_up(in_features, 128)
    n_pad = _round_up(num_classes, 128)

    w_t = jnp.pad(weight.T, ((0, k_pad - in_features), (0, n_pad - num_classes)))
    if param_dtype is not None:
        w_t = w_t.astype(param_dtype)
    bias_row = jnp.pad(bias.astype(jnp.float32), (0, n_pad - num_classes))
    bias_row = bias_row.reshape(1, n_pad)
    return w_t, bias_row


# ---------------------------------------------------------------------------
# Forward pass
# ---------------------------------------------------------------------------
@functools.partial(
    jax.jit, static_argnames=("num_classes", "tm_cap", "tn_cap", "tk_cap")
)
def classification_head(x, w_t, bias_row, *, num_classes,
                        tm_cap=512, tn_cap=512, tk_cap=2048):
    """y = x @ weight.T + bias, using pre-prepared (w_t, bias_row).

    x:        (batch, in_features)
    w_t:      (K_pad, N_pad)   from prepare_params
    bias_row: (1, N_pad) f32   from prepare_params
    returns   (batch, num_classes) in x.dtype
    """
    batch, in_features = x.shape
    k_pad, n_pad = w_t.shape
    compute_dtype = w_t.dtype
    out_dtype = x.dtype

    # ---- tile selection (problem-aware, dtype-aware) ----
    sub = _sublane_multiple(compute_dtype)
    tm = min(tm_cap, _round_up(batch, sub))
    m_pad = _round_up(batch, tm)
    grid_m = m_pad // tm

    tk = _largest_tile(k_pad, tk_cap)

    # v7x has 2 TensorCores: if there is only one M tile, keep >= 2 N tiles.
    n_cap = tn_cap
    if grid_m == 1 and n_pad >= 256:
        n_cap = min(tn_cap, n_pad // 2)
    tn = _largest_tile(n_pad, n_cap)

    grid = (grid_m, n_pad // tn, k_pad // tk)

    # ---- only x (small, batch-sized) is padded / cast per call ----
    x_c = x.astype(compute_dtype)
    if m_pad != batch or k_pad != in_features:
        x_c = jnp.pad(x_c, ((0, m_pad - batch), (0, k_pad - in_features)))

    f32_out = out_dtype == jnp.float32
    kernel = _linear_kernel_f32_out if f32_out else _linear_kernel_acc
    scratch = [] if f32_out else [pltpu.VMEM((tm, tn), jnp.float32)]

    in_item = jnp.dtype(compute_dtype).itemsize
    out_item = jnp.dtype(out_dtype).itemsize

    # Double-buffered x/w/out + (optional) f32 accumulator + bias.
    vmem_bytes = (
        2 * tm * tk * in_item
        + 2 * tk * tn * in_item
        + 2 * tm * tn * out_item
        + (0 if f32_out else tm * tn * 4)
        + 2 * n_pad * 4
    )
    vmem_limit = min(max(32 << 20, int(vmem_bytes * 1.25)), 56 << 20)

    cost = pl.CostEstimate(
        flops=2 * m_pad * n_pad * k_pad,
        transcendentals=0,
        bytes_accessed=(
            m_pad * k_pad * in_item
            + k_pad * n_pad * in_item
            + n_pad * 4
            + m_pad * n_pad * out_item
        ),
    )

    out_p = pl.pallas_call(
        kernel,
        out_shape=jax.ShapeDtypeStruct((m_pad, n_pad), out_dtype),
        grid_spec=pltpu.PrefetchScalarGridSpec(
            num_scalar_prefetch=0,
            grid=grid,
            in_specs=[
                pl.BlockSpec((tm, tk), lambda i, j, k: (i, k)),   # x
                pl.BlockSpec((tk, tn), lambda i, j, k: (k, j)),   # weight.T (K, N)
                pl.BlockSpec((1, tn), lambda i, j, k: (0, j)),    # bias (f32)
            ],
            out_specs=pl.BlockSpec((tm, tn), lambda i, j, k: (i, j)),
            scratch_shapes=scratch,
        ),
        compiler_params=pltpu.CompilerParams(
            dimension_semantics=("parallel", "parallel", "arbitrary"),
            vmem_limit_bytes=vmem_limit,
        ),
        cost_estimate=cost,
    )(x_c, w_t, bias_row)

    if (m_pad, n_pad) == (batch, num_classes):
        return out_p
    return out_p[:batch, :num_classes]


if __name__ == "__main__":
    # Small shapes consistent with the module: batch=2, in_features=32, num_classes=8
    batch, in_features, num_classes = 2, 32, 8

    key = jax.random.PRNGKey(0)
    kx, kw, kb = jax.random.split(key, 3)

    x = jax.random.normal(kx, (batch, in_features), dtype=jnp.float32)
    # Deterministic parameter init (mimics nn.Linear's uniform(-1/sqrt(in), 1/sqrt(in)))
    bound = 1.0 / (in_features ** 0.5)
    weight = jax.random.uniform(kw, (num_classes, in_features),
                                minval=-bound, maxval=bound, dtype=jnp.float32)
    bias = jax.random.uniform(kb, (num_classes,),
                              minval=-bound, maxval=bound, dtype=jnp.float32)

    # One-time parameter prep (outside the hot path).  Pass
    # param_dtype=jnp.bfloat16 to halve weight HBM traffic in production.
    w_t, bias_row = prepare_params(weight, bias, param_dtype=None)

    y = classification_head(x, w_t, bias_row, num_classes=num_classes)
    jax.block_until_ready(y)

    # Reference check against plain JAX (same math as torch.nn.Linear forward)
    y_ref = x @ weight.T + bias
    assert y.shape == (batch, num_classes)
    assert jnp.allclose(y, y_ref, atol=1e-5, rtol=1e-5)

    print("KERNEL_OK")
</pallas_src>

<mosaic_0001>
module attributes {stable_mosaic.version = 11 : i64} {
  func.func @_linear_kernel_f32_out(%arg0: i32, %arg1: i32, %arg2: i32, %arg3: memref<8x128xf32, #tpu.memory_space<vmem>>, %arg4: memref<128x128xf32, #tpu.memory_space<vmem>>, %arg5: memref<1x128xf32, #tpu.memory_space<vmem>>, %arg6: memref<8x128xf32, #tpu.memory_space<vmem>>) attributes {dimension_semantics = [#tpu.dimension_semantics<parallel>, #tpu.dimension_semantics<parallel>, #tpu.dimension_semantics<arbitrary>], iteration_bounds = array<i64: 1, 1, 1>, scalar_prefetch = 0 : i64, scratch_operands = 0 : i64, tpu.core_type = #tpu.core_type<tc>, window_params = [{transform_indices = @transform_0, window_bounds = array<i64: 8, 128>}, {transform_indices = @transform_1, window_bounds = array<i64: 128, 128>}, {transform_indices = @transform_2, window_bounds = array<i64: 1, 128>}, {transform_indices = @transform_3, window_bounds = array<i64: 8, 128>}]} {
    %c0_i32 = arith.constant 0 : i32
    %0 = arith.cmpi eq, %arg2, %c0_i32 : i32
    %1 = arith.extui %0 : i1 to i32
    %c0_i32_0 = arith.constant 0 : i32
    %2 = arith.cmpi ne, %1, %c0_i32_0 : i32
    scf.if %2 {
      %c0_8 = arith.constant 0 : index
      %c0_9 = arith.constant 0 : index
      %9 = vector.load %arg5[%c0_8, %c0_9] : memref<1x128xf32, #tpu.memory_space<vmem>>, vector<1x128xf32>
      %10 = vector.shape_cast %9 : vector<1x128xf32> to vector<1x128xf32>
      %11 = vector.broadcast %10 : vector<1x128xf32> to vector<8x128xf32>
      %c0_10 = arith.constant 0 : index
      %c0_11 = arith.constant 0 : index
      %12 = vector.load %arg6[%c0_10, %c0_11] : memref<8x128xf32, #tpu.memory_space<vmem>>, vector<8x128xf32>
      tpu.vector_store %arg6[%c0_10, %c0_11], %11 {strides = array<i32>} : memref<8x128xf32, #tpu.memory_space<vmem>>, vector<8x128xf32>,
    } else {
    }
    %c0 = arith.constant 0 : index
    %c0_1 = arith.constant 0 : index
    %3 = vector.load %arg6[%c0, %c0_1] : memref<8x128xf32, #tpu.memory_space<vmem>>, vector<8x128xf32>
    %c0_2 = arith.constant 0 : index
    %c0_3 = arith.constant 0 : index
    %4 = vector.load %arg3[%c0_2, %c0_3] : memref<8x128xf32, #tpu.memory_space<vmem>>, vector<8x128xf32>
    %c0_4 = arith.constant 0 : index
    %c0_5 = arith.constant 0 : index
    %5 = vector.load %arg4[%c0_4, %c0_5] : memref<128x128xf32, #tpu.memory_space<vmem>>, vector<128x128xf32>
    %cst = arith.constant dense<0.000000e+00> : vector<8x128xf32>
    %6 = tpu.matmul %4, %5, %cst {dimension_numbers = #tpu.dot_dimension_numbers<[1], [0], [0], [1], [0, 0, 1, 1], [], []>} : vector<8x128xf32>, vector<128x128xf32>, vector<8x128xf32> -> vector<8x128xf32>
    %7 = arith.addf %3, %6 : vector<8x128xf32>
    %c0_6 = arith.constant 0 : index
    %c0_7 = arith.constant 0 : index
    %8 = vector.load %arg6[%c0_6, %c0_7] : memref<8x128xf32, #tpu.memory_space<vmem>>, vector<8x128xf32>
    tpu.vector_store %arg6[%c0_6, %c0_7], %7 {strides = array<i32>} : memref<8x128xf32, #tpu.memory_space<vmem>>, vector<8x128xf32>,
    return
  }
  func.func @transform_0(%arg0: i32, %arg1: i32, %arg2: i32) -> (i32, i32) {
    %c0_i32 = arith.constant 0 : i32
    return %arg0, %arg2 : i32, i32
  }
  func.func @transform_1(%arg0: i32, %arg1: i32, %arg2: i32) -> (i32, i32) {
    %c0_i32 = arith.constant 0 : i32
    return %arg2, %arg1 : i32, i32
  }
  func.func @transform_2(%arg0: i32, %arg1: i32, %arg2: i32) -> (i32, i32) {
    %c0_i32 = arith.constant 0 : i32
    %c0_i32_0 = arith.constant 0 : i32
    return %c0_i32, %arg1 : i32, i32
  }
  func.func @transform_3(%arg0: i32, %arg1: i32, %arg2: i32) -> (i32, i32) {
    %c0_i32 = arith.constant 0 : i32
    return %arg0, %arg1 : i32, i32
  }
}

</mosaic_0001>

<llo_original>
// kernel: classification_head.1
$region0: #{classification_head.1}
  #allocation0 [shape = 'u32[]', space=smem, size = 0x4, offset = 0x4, fixed_abs, tag = 'smem constant byte address 0x4 - core index']
  #allocation1 [shape = 'u32[72,128]{1,0:T(1,128)}', space=vmem, size = 0x9000, scoped, tag = 'internal scratch']
  %s0 = inlined_call_operand.vmem [shape: f32[8,128], index: 0, kind: input, shape index: {}]
  %s1 = inlined_call_operand.hbm [shape: f32[128,128], index: 1, kind: input, shape index: {}]
  %s2 = inlined_call_operand.vmem [shape: f32[1,128], index: 2, kind: input, shape index: {}]
  %s3 = inlined_call_operand.vmem [shape: f32[8,128], index: 3, kind: output, shape index: {}]
  %s4 = sld [smem:[#allocation0]]
  $region30: #{classification_head.1} parent=0
    _
  %s6 = ssub.s32 1, %s4
  %s7 = scalar_select 0, %s6, %s4
  $region1: #{classification_head.1} parent=0
    #allocation2 [shape = 'u8[65536]{0}', space=vmem, size = 0x10000, scoped, tag = 'input window, operand 1, single buffered']
    #allocation3 [shape = 's32[1]{0}', space=sflag, size = 0x4, scoped, tag = 'scoped memory for classification_head.1']
    %8 = vsyncpa [#allocation3], 0
    // Predicated region
    $region2: #{classification_head.1} parent=1 // pred_check
      _
    $region3: #{classification_head.1} parent=1 // pred_check_branch
      %10 = sbr.rel (0) target = $region5
    $region4: #{classification_head.1} parent=1 // pred_region
      _
    $region5: #{classification_head.1} parent=1 // pred_fallthru
      _
    // Predicated region
    $region6: #{classification_head.1} parent=1 // pred_check
      _
    $region7: #{classification_head.1} parent=1 // pred_check_branch
      %12 = sbr.rel (0) target = $region9
    $region8: #{classification_head.1} parent=1 // pred_region
      %14 = vsyncadd [#allocation3], 0
      %s15 = sshll.u32 %s1, 4
      %s16 = int_to_ptr.hbm [resolvable:$true] %s15
      %s17 = sshll.u32 [#allocation2], 4
      %s18 = int_to_ptr.vmem [resolvable:$true] %s17
      %23 = dma.hbm_to_vmem [thread:$0]  %s16, 2048, %s18, [#allocation3], 128, 128, 8
    $region9: #{classification_head.1} parent=1 // pred_fallthru
      _
    // Predicated region
    $region10: #{classification_head.1} parent=1 // pred_check
      _
    $region11: #{classification_head.1} parent=1 // pred_check_branch
      %25 = sbr.rel (0) target = $region13
    $region12: #{classification_head.1} parent=1 // pred_region
      _
    $region13: #{classification_head.1} parent=1 // pred_fallthru
      _
    // Predicated region
    $region14: #{classification_head.1} parent=1 // pred_check
      _
    $region15: #{classification_head.1} parent=1 // pred_check_branch
      %27 = sbr.rel (0) target = $region17
    $region16: #{classification_head.1} parent=1 // pred_region
      %29 = dma.done [#allocation3], 2048
    $region17: #{classification_head.1} parent=1 // pred_fallthru
      _
    %p30 = scmp.eq.s32.totalorder 0, 0
    // Predicated region
    $region18: #{classification_head.1} parent=1 // pred_check
      %p31 = pneg %p30
    $region19: #{classification_head.1} parent=1 // pred_check_branch
      %33 = sbr.rel (%p31) target = $region21
    $region20: #{classification_head.1} parent=1 // pred_region
      %v34 = vld [vmem:[%s2] sm:$0x1]
      %v36 = vperm.slane %v34, 0
      %38 = vst [vmem:[%s3] sm:$0xff] %v36
    $region21: #{classification_head.1} parent=1 // pred_fallthru
      _
    %v39 = vld [vmem:[%s3] sm:$0xff]
    %v40 = vld [vmem:[%s0] sm:$0xff]
    %v41 = vld [vmem:[#allocation2] sm:$0xff]
    %v42 = vld [vmem:[#allocation2 + $0x8] sm:$0xff]
    %v43 = vld [vmem:[#allocation2 + $0x10] sm:$0xff]
    %v44 = vld [vmem:[#allocation2 + $0x18] sm:$0xff]
    %v45 = vld [vmem:[#allocation2 + $0x20] sm:$0xff]
    %v46 = vld [vmem:[#allocation2 + $0x28] sm:$0xff]
    %v47 = vld [vmem:[#allocation2 + $0x30] sm:$0xff]
    %v48 = vld [vmem:[#allocation2 + $0x38] sm:$0xff]
    %v49 = vld [vmem:[#allocation2 + $0x40] sm:$0xff]
    %v50 = vld [vmem:[#allocation2 + $0x48] sm:$0xff]
    %v51 = vld [vmem:[#allocation2 + $0x50] sm:$0xff]
    %v52 = vld [vmem:[#allocation2 + $0x58] sm:$0xff]
    %v53 = vld [vmem:[#allocation2 + $0x60] sm:$0xff]
    %v54 = vld [vmem:[#allocation2 + $0x68] sm:$0xff]
    %v55 = vld [vmem:[#allocation2 + $0x70] sm:$0xff]
    %v56 = vld [vmem:[#allocation2 + $0x78] sm:$0xff]
    %57 = vmatpush.msra.mxu0 %v56
    %58 = vmatpush.msra.mxu0 %v55
    %59 = vmatpush.msra.mxu0 %v54
    %60 = vmatpush.msra.mxu0 %v53
    %61 = vmatpush.msra.mxu0 %v52
    %62 = vmatpush.msra.mxu0 %v51
    %63 = vmatpush.msra.mxu0 %v50
    %64 = vmatpush.msra.mxu0 %v49
    %65 = vmatpush.msra.mxu0 %v48
    %66 = vmatpush.msra.mxu0 %v47
    %67 = vmatpush.msra.mxu0 %v46
    %68 = vmatpush.msra.mxu0 %v45
    %69 = vmatpush.msra.mxu0 %v44
    %70 = vmatpush.msra.mxu0 %v43
    %71 = vmatpush.msra.mxu0 %v42
    %72 = vmatpush.msra.mxu0 %v41
    %73 = vmatmul.f32.gmra.mxu0 %v40
    %v74 = vpop.f32.mrf.mxu0
    %v75 = vadd.f32 0.0, %v74
    %76 = vdwg.mxu0
    %v77 = vadd.f32 %v39, %v75
    %78 = vst [vmem:[%s3] sm:$0xff] %v77
    // Predicated region
    $region22: #{classification_head.1} parent=1 // pred_check
      _
    $region23: #{classification_head.1} parent=1 // pred_check_branch
      %80 = sbr.rel (0) target = $region25
    $region24: #{classification_head.1} parent=1 // pred_region
      _
    $region25: #{classification_head.1} parent=1 // pred_fallthru
      _
    // Predicated region
    $region26: #{classification_head.1} parent=1 // pred_check
      _
    $region27: #{classification_head.1} parent=1 // pred_check_branch
      %82 = sbr.rel (0) target = $region29
    $region28: #{classification_head.1} parent=1 // pred_region
      _
    $region29: #{classification_head.1} parent=1 // pred_fallthru
      _
    %83 = vsyncpa [#allocation3], 1

</llo_original>
